<compile_context>
chip_gen: v7x
topology: tpu7x:2x2x1
jax: 0.10.0
libtpu: 0.0.40
codegen_flags: <defaults>
</compile_context>

<pallas_src>
import functools

import jax
import jax.numpy as jnp
from jax.experimental import pallas as pl
from jax.experimental.pallas import tpu as pltpu

LANE = 128
_MIB = 1 << 20


def _s2norm_kernel(med_ref, scale_ref, x_ref, o_ref):
    """One grid step = all channels x BN lanes.

    med_ref / scale_ref : VMEM (C, 1) float32 per-channel median and scale
    x_ref / o_ref       : VMEM (C, BN) tile of the flattened (C, T*H*W) tensor
    """
    x = x_ref[...].astype(jnp.float32)                 # .to(torch.float)
    o_ref[...] = (x - med_ref[...]) / scale_ref[...]   # Normalize(mean, std)


def _round_up(a: int, b: int) -> int:
    return -(-a // b) * b


def _sublane_pad(c: int, dtype) -> int:
    """Physical channel count once packed into (8*packing, 128) vreg tiles."""
    itemsize = jnp.dtype(dtype).itemsize
    sub = 8 * max(1, 4 // max(itemsize, 1))    # f32 -> 8, bf16/u16 -> 16, i8 -> 32
    return _round_up(max(c, 1), sub)


def _default_block_bytes() -> int:
    """Generation-aware f32 output-tile byte target."""
    try:
        kind = jax.devices()[0].device_kind.lower()
    except Exception:  # pragma: no cover - CPU/interpret fallback
        return 4 * _MIB
    if "v7" in kind:
        return 6 * _MIB          # 3.2 TB/s HBM: bigger tiles amortize step overhead
    if "v6" in kind:
        return 4 * _MIB
    if "v5" in kind and ("lite" in kind or "5e" in kind):
        return 3 * _MIB          # v5e: 16 MiB scoped-VMEM default, slower DMA
    return 4 * _MIB


def _s2_normalize_impl(x, med2, scale2, *, target_block_bytes=None,
                       donate_input=False):
    assert x.ndim == 4, "S2Normalize expects a 4D tensor (C, T, H, W)"
    C, T, H, W = x.shape
    n = T * H * W

    # Free, contiguous reshape (metadata only): lane-dense last dim.
    xf = x.reshape(C, n)

    if target_block_bytes is None:
        target_block_bytes = _default_block_bytes()

    c_pad_out = _sublane_pad(C, jnp.float32)   # output is always f32
    c_pad_in = _sublane_pad(C, xf.dtype)
    in_itemsize = jnp.dtype(xf.dtype).itemsize

    # Tile width: multiple of 128 lanes, sized so the PADDED f32 output tile is
    # ~target_block_bytes, never wider than the lane-rounded row.
    bn = (target_block_bytes // 4) // c_pad_out
    bn = max(LANE, (bn // LANE) * LANE)
    bn = min(bn, _round_up(n, LANE))
    # Keep >= 2 grid steps whenever possible so the parallel axis can shard
    # across v7x's two TensorCores (no-op on single-TC v5e / v6e).
    half_cap = max(LANE, _round_up(pl.cdiv(n, 2), LANE))
    bn = min(bn, half_cap)
    num_tiles = pl.cdiv(n, bn)     # last tile may be partial (Pallas masks it)

    # VMEM budget: default Buffered(2) on input + output tiles, plus the tiny
    # resident med/scale blocks.  Clamp to [16 MiB, 48 MiB] (<= v7x physical).
    out_tile_bytes = c_pad_out * bn * 4
    in_tile_bytes = c_pad_in * bn * in_itemsize
    vmem_needed = 2 * (out_tile_bytes + in_tile_bytes) + 2 * c_pad_out * LANE * 4
    vmem_limit = int(min(max(vmem_needed + 4 * _MIB, 16 * _MIB), 48 * _MIB))

    # Only alias when the caller actually donates x (otherwise XLA inserts a
    # defensive full-size copy: an extra HBM pass on a bandwidth-bound kernel).
    io_alias = {2: 0} if (donate_input and xf.dtype == jnp.float32) else {}

    out = pl.pallas_call(
        _s2norm_kernel,
        out_shape=jax.ShapeDtypeStruct((C, n), jnp.float32),
        grid=(num_tiles,),
        in_specs=[
            pl.BlockSpec((C, 1), lambda i: (0, 0)),    # med   (resident)
            pl.BlockSpec((C, 1), lambda i: (0, 0)),    # scale (resident)
            pl.BlockSpec((C, bn), lambda i: (0, i)),   # x tile
        ],
        out_specs=pl.BlockSpec((C, bn), lambda i: (0, i)),
        compiler_params=pltpu.CompilerParams(
            dimension_semantics=("parallel",),
            vmem_limit_bytes=vmem_limit,
        ),
        input_output_aliases=io_alias,
    )(med2, scale2, xf)

    return out.reshape(C, T, H, W)


def s2_normalize_pallas(x, med, scale, *, target_block_bytes=None,
                        donate_input=False):
    """One-shot API: apply per-channel robust normalization to (C, T, H, W)."""
    med2 = jnp.asarray(med, jnp.float32).reshape(-1, 1)
    scale2 = jnp.asarray(scale, jnp.float32).reshape(-1, 1)
    return _s2_normalize_impl(x, med2, scale2,
                              target_block_bytes=target_block_bytes,
                              donate_input=donate_input)


def make_s2_normalize(med, scale, *, target_block_bytes=None,
                      donate_input=False):
    """Factory mirroring the nn.Module: precompute med/scale once, return a
    jitted per-sample transform (removes tiny per-call prep dispatches)."""
    med2 = jnp.asarray(med, jnp.float32).reshape(-1, 1)
    scale2 = jnp.asarray(scale, jnp.float32).reshape(-1, 1)
    impl = functools.partial(_s2_normalize_impl,
                             target_block_bytes=target_block_bytes,
                             donate_input=donate_input)

    @jax.jit
    def apply(x):
        return impl(x, med2, scale2)

    return apply


def s2_normalize_reference(x, med, scale):
    """Pure-JAX reference matching the PyTorch forward."""
    med = jnp.asarray(med, jnp.float32).reshape(-1, 1, 1, 1)
    scale = jnp.asarray(scale, jnp.float32).reshape(-1, 1, 1, 1)
    return (x.astype(jnp.float32) - med) / scale


if __name__ == "__main__":
    key0, key1 = jax.random.split(jax.random.PRNGKey(0))

    # deterministic per-band robust stats (module __init__ takes med/scale lists)
    med = [0.5, -0.25, 1.0, 2.0]
    scale = [0.5, 2.0, 1.5, 3.0]

    # small shapes: C=4 bands, T=8 dates, 16x16 spatial
    C, T, H, W = 4, 8, 16, 16
    x = jax.random.normal(key0, (C, T, H, W), dtype=jnp.float32) * 3.0 + 1.0

    normalize = make_s2_normalize(med, scale)          # hoisted med/scale prep
    out = jax.block_until_ready(normalize(x))
    ref = s2_normalize_reference(x, med, scale)
    assert out.shape == x.shape and out.dtype == jnp.float32
    assert jnp.allclose(out, ref, rtol=1e-5, atol=1e-6), "mismatch vs reference"

    # non-128-divisible spatial size: exercises Pallas partial-block masking
    # (no host-side pad / slice copies in the wrapper)
    C2, T2, H2, W2 = 4, 5, 15, 13
    x2 = jax.random.normal(key1, (C2, T2, H2, W2), dtype=jnp.float32)
    out2 = jax.block_until_ready(s2_normalize_pallas(x2, med, scale))
    ref2 = s2_normalize_reference(x2, med, scale)
    assert out2.shape == x2.shape and out2.dtype == jnp.float32
    assert jnp.allclose(out2, ref2, rtol=1e-5, atol=1e-6), "mismatch (odd shape)"

    print("KERNEL_OK")
</pallas_src>

<mosaic_0001>
module attributes {stable_mosaic.version = 11 : i64} {
  func.func @_s2norm_kernel(%arg0: i32, %arg1: memref<4x1xf32, #tpu.memory_space<vmem>>, %arg2: memref<4x1xf32, #tpu.memory_space<vmem>>, %arg3: memref<4x1024xf32, #tpu.memory_space<vmem>>, %arg4: memref<4x1024xf32, #tpu.memory_space<vmem>>) attributes {dimension_semantics = [#tpu.dimension_semantics<parallel>], iteration_bounds = array<i64: 2>, scalar_prefetch = 0 : i64, scratch_operands = 0 : i64, tpu.core_type = #tpu.core_type<tc>, window_params = [{pipeline_mode = #tpu.pipeline_mode<synchronous>, transform_indices = @transform_0, window_bounds = array<i64: 4, 1>}, {pipeline_mode = #tpu.pipeline_mode<synchronous>, transform_indices = @transform_1, window_bounds = array<i64: 4, 1>}, {transform_indices = @transform_2, window_bounds = array<i64: 4, 1024>}, {transform_indices = @transform_3, window_bounds = array<i64: 4, 1024>}]} {
    %c0 = arith.constant 0 : index
    %c0_0 = arith.constant 0 : index
    %0 = vector.load %arg3[%c0, %c0_0] : memref<4x1024xf32, #tpu.memory_space<vmem>>, vector<4x1024xf32>
    %c0_1 = arith.constant 0 : index
    %c0_2 = arith.constant 0 : index
    %1 = vector.load %arg1[%c0_1, %c0_2] : memref<4x1xf32, #tpu.memory_space<vmem>>, vector<4x1xf32>
    %2 = vector.broadcast %1 : vector<4x1xf32> to vector<4x1024xf32>
    %3 = arith.subf %0, %2 : vector<4x1024xf32>
    %c0_3 = arith.constant 0 : index
    %c0_4 = arith.constant 0 : index
    %4 = vector.load %arg2[%c0_3, %c0_4] : memref<4x1xf32, #tpu.memory_space<vmem>>, vector<4x1xf32>
    %5 = vector.broadcast %4 : vector<4x1xf32> to vector<4x1024xf32>
    %6 = arith.divf %3, %5 : vector<4x1024xf32>
    %c0_5 = arith.constant 0 : index
    %c0_6 = arith.constant 0 : index
    %7 = vector.load %arg4[%c0_5, %c0_6] : memref<4x1024xf32, #tpu.memory_space<vmem>>, vector<4x1024xf32>
    tpu.vector_store %arg4[%c0_5, %c0_6], %6 {strides = array<i32>} : memref<4x1024xf32, #tpu.memory_space<vmem>>, vector<4x1024xf32>,
    return
  }
  func.func @transform_0(%arg0: i32) -> (i32, i32) {
    %c0_i32 = arith.constant 0 : i32
    %c0_i32_0 = arith.constant 0 : i32
    %c0_i32_1 = arith.constant 0 : i32
    return %c0_i32, %c0_i32_0 : i32, i32
  }
  func.func @transform_1(%arg0: i32) -> (i32, i32) {
    %c0_i32 = arith.constant 0 : i32
    %c0_i32_0 = arith.constant 0 : i32
    %c0_i32_1 = arith.constant 0 : i32
    return %c0_i32, %c0_i32_0 : i32, i32
  }
  func.func @transform_2(%arg0: i32) -> (i32, i32) {
    %c0_i32 = arith.constant 0 : i32
    %c0_i32_0 = arith.constant 0 : i32
    return %c0_i32, %arg0 : i32, i32
  }
  func.func @transform_3(%arg0: i32) -> (i32, i32) {
    %c0_i32 = arith.constant 0 : i32
    %c0_i32_0 = arith.constant 0 : i32
    return %c0_i32, %arg0 : i32, i32
  }
}

</mosaic_0001>

<llo_original>
// kernel: apply.1
$region0: #{apply.1}
  #allocation0 [shape = 'u32[]', space=smem, size = 0x4, offset = 0x4, fixed_abs, tag = 'smem constant byte address 0x4 - core index']
  #allocation1 [shape = 'u32[144,128]{1,0:T(1,128)}', space=vmem, size = 0x12000, scoped, tag = 'internal scratch']
  %s0 = inlined_call_operand.vmem [shape: f32[4,1], index: 0, kind: input, shape index: {}]
  %s1 = inlined_call_operand.vmem [shape: f32[4,1], index: 1, kind: input, shape index: {}]
  %s2 = inlined_call_operand.vmem [shape: f32[4,2048], index: 2, kind: input, shape index: {}]
  %s3 = inlined_call_operand.vmem [shape: f32[4,2048], index: 3, kind: output, shape index: {}]
  %s4 = sld [smem:[#allocation0]]
  $region45: #{apply.1} parent=0
    _
  %s6 = ssub.s32 1, %s4
  %s7 = scalar_select 0, %s6, %s4
  loop: start=0, step=1, limit=4
  $region2: #{apply.1} parent=0 // loop_pre_header
    _
  $region3: #{apply.1} parent=0 // loop_header
    %s9 = sphi 0, %s13
    %p10 = scmp.ge.s32.totalorder %s9, 4
    %s17 = sphi 0, %s17
    %s19 = sphi 0, %s17
    %s20 = sphi 0, %s19
    %s34 = sphi 0, %s20
    %s38 = sphi 0, %s38
    %s40 = sphi 0, %s38
    %s41 = sphi 0, %s40
    %s55 = sphi 0, %s41
    %s61 = sphi 0, %s63
    %s64 = sphi 0, %s61
    %s65 = sphi 0, %s64
    %s81 = sphi 0, %s65
    %s87 = sphi 0, %s89
    %s90 = sphi 0, %s87
    %s91 = sphi 0, %s90
    %s107 = sphi 0, %s91
  $region4: #{apply.1} parent=0 // loop_header_branch
    %12 = sbr.rel (%p10) target = $region8
  $region5: #{apply.1} parent=0 // loop_body
    %s14 = ssub.s32 %s9, 1
    %s15 = ssub.s32 %s9, 2
    %s16 = sadd.s32 %s9, 1
    %s18 = sadd.s32 %s17, 1
    %p21 = scmp.eq.s32.totalorder %s9, 1
    %p22 = scmp.ne.s32.totalorder %s17, %s19
    %p23 = scmp.eq.s32.totalorder %s9, 0
    %p24 = por %p22, %p23
    %p25 = scmp.ne.s32.totalorder %s17, %s19
    %p26 = scmp.eq.s32.totalorder %s14, 1
    %p27 = por %p25, %p26
    %p28 = scmp.ne.s32.totalorder %s19, %s20
    %p29 = scmp.eq.s32.totalorder %s14, 0
    %p30 = por %p28, %p29
    %p31 = scmp.ne.s32.totalorder %s19, %s20
    %p32 = scmp.eq.s32.totalorder %s15, 1
    %p33 = por %p31, %p32
    %p35 = scmp.ne.s32.totalorder %s20, %s34
    %p36 = scmp.eq.s32.totalorder %s15, 0
    %p37 = por %p35, %p36
    %s39 = sadd.s32 %s38, 1
    %p42 = scmp.eq.s32.totalorder %s9, 1
    %p43 = scmp.ne.s32.totalorder %s38, %s40
    %p44 = scmp.eq.s32.totalorder %s9, 0
    %p45 = por %p43, %p44
    %p46 = scmp.ne.s32.totalorder %s38, %s40
    %p47 = scmp.eq.s32.totalorder %s14, 1
    %p48 = por %p46, %p47
    %p49 = scmp.ne.s32.totalorder %s40, %s41
    %p50 = scmp.eq.s32.totalorder %s14, 0
    %p51 = por %p49, %p50
    %p52 = scmp.ne.s32.totalorder %s40, %s41
    %p53 = scmp.eq.s32.totalorder %s15, 1
    %p54 = por %p52, %p53
    %p56 = scmp.ne.s32.totalorder %s41, %s55
    %p57 = scmp.eq.s32.totalorder %s15, 0
    %p58 = por %p56, %p57
    %s59 = ssub.s32 %s9, %s16
    %p60 = scmp.eq.s32.totalorder %s59, 0
    %s62 = sadd.s32 %s61, 1
    %s63 = scalar_select %p60, %s61, %s62
    %p66 = pneg %p60
    %p67 = scmp.eq.s32.totalorder %s9, 1
    %p68 = por %p66, %p67
    %p69 = scmp.ne.s32.totalorder %s61, %s64
    %p70 = scmp.eq.s32.totalorder %s9, 0
    %p71 = por %p69, %p70
    %p72 = scmp.ne.s32.totalorder %s61, %s64
    %p73 = scmp.eq.s32.totalorder %s14, 1
    %p74 = por %p72, %p73
    %p75 = scmp.ne.s32.totalorder %s64, %s65
    %p76 = scmp.eq.s32.totalorder %s14, 0
    %p77 = por %p75, %p76
    %p78 = scmp.ne.s32.totalorder %s64, %s65
    %p79 = scmp.eq.s32.totalorder %s15, 1
    %p80 = por %p78, %p79
    %p82 = scmp.ne.s32.totalorder %s65, %s81
    %p83 = scmp.eq.s32.totalorder %s15, 0
    %p84 = por %p82, %p83
    %s85 = ssub.s32 %s9, %s16
    %p86 = scmp.eq.s32.totalorder %s85, 0
    %s88 = sadd.s32 %s87, 1
    %s89 = scalar_select %p86, %s87, %s88
    %p92 = pneg %p86
    %p93 = scmp.eq.s32.totalorder %s9, 1
    %p94 = por %p92, %p93
    %p95 = scmp.ne.s32.totalorder %s87, %s90
    %p96 = scmp.eq.s32.totalorder %s9, 0
    %p97 = por %p95, %p96
    %p98 = scmp.ne.s32.totalorder %s87, %s90
    %p99 = scmp.eq.s32.totalorder %s14, 1
    %p100 = por %p98, %p99
    %p101 = scmp.ne.s32.totalorder %s90, %s91
    %p102 = scmp.eq.s32.totalorder %s14, 0
    %p103 = por %p101, %p102
    %p104 = scmp.ne.s32.totalorder %s90, %s91
    %p105 = scmp.eq.s32.totalorder %s15, 1
    %p106 = por %p104, %p105
    %p108 = scmp.ne.s32.totalorder %s91, %s107
    %p109 = scmp.eq.s32.totalorder %s15, 0
    %p110 = por %p108, %p109
    %p111 = scmp.le.s32.totalorder 1, %s9
    %p112 = scmp.lt.s32.totalorder %s9, 3
    %p113 = pnand %p111, %p112
    %p114 = pneg %p113
    // Predicated region
    $region9: #{apply.1} parent=5 // pred_check
      _
    $region10: #{apply.1} parent=5 // pred_check_branch
      %116 = sbr.rel (%p113) target = $region12
    $region11: #{apply.1} parent=5 // pred_region
      %s117 = ssub.s32 %s9, 1
      // Predicated region
      $region13: #{apply.1} parent=11 // pred_check
        %p118 = pneg %p30
      $region14: #{apply.1} parent=11 // pred_check_branch
        %120 = sbr.rel (%p118) target = $region16
      $region15: #{apply.1} parent=11 // pred_region
        _
      $region16: #{apply.1} parent=11 // pred_fallthru
        _
      // Predicated region
      $region17: #{apply.1} parent=11 // pred_check
        %p121 = pneg %p51
      $region18: #{apply.1} parent=11 // pred_check_branch
        %123 = sbr.rel (%p121) target = $region20
      $region19: #{apply.1} parent=11 // pred_region
        _
      $region20: #{apply.1} parent=11 // pred_fallthru
        _
    $region12: #{apply.1} parent=5 // pred_fallthru
      _
    %p124 = scmp.lt.s32.totalorder %s9, 2
    // Predicated region
    $region21: #{apply.1} parent=5 // pred_check
      %p125 = pneg %p124
    $region22: #{apply.1} parent=5 // pred_check_branch
      %127 = sbr.rel (%p125) target = $region24
    $region23: #{apply.1} parent=5 // pred_region
      // Predicated region
      $region25: #{apply.1} parent=23 // pred_check
        %p128 = pneg %p71
      $region26: #{apply.1} parent=23 // pred_check_branch
        %130 = sbr.rel (%p128) target = $region28
      $region27: #{apply.1} parent=23 // pred_region
        %s131 = smul.u32 8, %s9
        %p132 = scmp.lt.s32.totalorder %s131, 15
        %s133 = scalar_select %p132, %s131, 15
        %s134 = smul.addr %s133, 4
        %s135 = scalar_lea.vmem %s2, %s134
        %s136 = smul.u32 8, %s9
      $region28: #{apply.1} parent=23 // pred_fallthru
        _
    $region24: #{apply.1} parent=5 // pred_fallthru
      _
    %p137 = scmp.le.s32.totalorder 1, %s9
    %p138 = scmp.lt.s32.totalorder %s9, 3
    %p139 = pnand %p137, %p138
    %p140 = pneg %p139
    // Predicated region
    $region29: #{apply.1} parent=5 // pred_check
      _
    $region30: #{apply.1} parent=5 // pred_check_branch
      %142 = sbr.rel (%p139) target = $region32
    $region31: #{apply.1} parent=5 // pred_region
      %s143 = ssub.s32 %s9, 1
      %p144 = pneg %p30
      %p145 = pneg %p27
      %p146 = pneg %p51
      %p147 = pneg %p48
      %s148 = smul.u32 8, %s14
      %p149 = scmp.lt.s32.totalorder %s148, 15
      %s150 = scalar_select %p149, %s148, 15
      %s151 = smul.addr %s150, 4
      %s152 = scalar_lea.vmem %s2, %s151
      %p153 = pneg %p77
      %p154 = pneg %p74
      %p155 = pneg %p103
      %p156 = pneg %p100
      %s157 = smul.u32 8, %s14
      %p158 = scmp.lt.s32.totalorder %s157, 15
      %s159 = scalar_select %p158, %s157, 15
      %s160 = smul.addr %s159, 4
      %s161 = scalar_lea.vmem %s3, %s160
      %s162 = smul.u32 8, %s14
      %p163 = scmp.lt.s32.totalorder %s162, 15
      %s164 = scalar_select %p163, %s162, 15
      %s165 = smul.addr %s164, 4
      %s166 = scalar_lea.vmem %s2, %s165
      %s167 = smul.u32 8, %s14
      %s168 = smul.u32 8, %s14
      %p169 = scmp.lt.s32.totalorder %s168, 15
      %s170 = scalar_select %p169, %s168, 15
      %s171 = smul.addr %s170, 4
      %s172 = scalar_lea.vmem %s3, %s171
      %s173 = smul.u32 8, %s14
      %v174 = vld [vmem:[%s166] sm:$0xff]
      %v175 = vld [vmem:[%s166 + $0x8] sm:$0xff]
      %v176 = vld [vmem:[%s166 + $0x10] sm:$0xff]
      %v177 = vld [vmem:[%s166 + $0x18] sm:$0xff]
      %v178 = vld [vmem:[%s0] sm:$0xf]
      %180 = vset.pattern.permute.xlu0 0
      %181 = vperm.xlu0 %180, %v178
      %v182 = vpop.permute.xlu0 %181
      %v184 = vunpack.c.l.s4 839922192
      %v185 = vunpack.c.0.s8 %v184
      %v186 = vlaneseq
      %v187 = vshrl.u32 %v186, 7
      %v188 = vsub.s32 %v185, %v187
      %v189 = vrot.slane %v182, %v188
      %v191 = vsub.f32 %v174, %v189
      %v192 = vsub.f32 %v175, %v189
      %v193 = vsub.f32 %v176, %v189
      %v194 = vsub.f32 %v177, %v189
      %v195 = vld [vmem:[%s1] sm:$0xf]
      %197 = vset.pattern.permute.xlu0 0
      %198 = vperm.xlu0 %197, %v195
      %v199 = vpop.permute.xlu0 %198
      %v201 = vunpack.c.l.s4 839922192
      %v202 = vunpack.c.0.s8 %v201
      %v203 = vlaneseq
      %v204 = vshrl.u32 %v203, 7
      %v205 = vsub.s32 %v202, %v204
      %v206 = vrot.slane %v199, %v205
      %v208 = vrcp.pop %v206
      %v209 = vmul.f32 %v191, %v208
      %v210 = vmul.f32 %v192, %v208
      %v211 = vmul.f32 %v193, %v208
      %v212 = vmul.f32 %v194, %v208
      %213 = vst [vmem:[%s172] sm:$0xff] %v209
      %214 = vst [vmem:[%s172 + $0x8] sm:$0xff] %v210
      %215 = vst [vmem:[%s172 + $0x10] sm:$0xff] %v211
      %216 = vst [vmem:[%s172 + $0x18] sm:$0xff] %v212
      %s217 = smul.u32 8, %s14
      %p218 = scmp.lt.s32.totalorder %s217, 15
      %s219 = scalar_select %p218, %s217, 15
      %s220 = smul.addr %s219, 4
      %s221 = scalar_lea.vmem %s3, %s220
      // Predicated region
      $region33: #{apply.1} parent=31 // pred_check
        %p222 = pneg %p100
      $region34: #{apply.1} parent=31 // pred_check_branch
        %224 = sbr.rel (%p222) target = $region36
      $region35: #{apply.1} parent=31 // pred_region
        %s225 = smul.u32 8, %s14
      $region36: #{apply.1} parent=31 // pred_fallthru
        _
    $region32: #{apply.1} parent=5 // pred_fallthru
      _
    %p226 = scmp.le.s32.totalorder 2, %s9
    // Predicated region
    $region37: #{apply.1} parent=5 // pred_check
      %p227 = pneg %p226
    $region38: #{apply.1} parent=5 // pred_check_branch
      %229 = sbr.rel (%p227) target = $region40
    $region39: #{apply.1} parent=5 // pred_region
      %s230 = ssub.s32 %s9, 2
      // Predicated region
      $region41: #{apply.1} parent=39 // pred_check
        %p231 = pneg %p106
      $region42: #{apply.1} parent=39 // pred_check_branch
        %233 = sbr.rel (%p231) target = $region44
      $region43: #{apply.1} parent=39 // pred_region
        %s234 = smul.u32 8, %s15
        %p235 = scmp.lt.s32.totalorder %s234, 15
        %s236 = scalar_select %p235, %s234, 15
        %s237 = smul.addr %s236, 4
        %s238 = scalar_lea.vmem %s3, %s237
      $region44: #{apply.1} parent=39 // pred_fallthru
        _
    $region40: #{apply.1} parent=5 // pred_fallthru
      _
  $region6: #{apply.1} parent=0 // loop_footer
    %s13 = sadd.s32 1, %s9
  $region7: #{apply.1} parent=0 // loop_footer_branch
    %8 = sbr.rel target = $region3
  $region8: #{apply.1} parent=0 // loop_exit
    _

</llo_original>
